<compile_context>
chip_gen: v7x
topology: tpu7x:2x2x1
jax: 0.10.0
libtpu: 0.0.40
codegen_flags: <defaults>
</compile_context>

<pallas_src>
import functools

import jax
import jax.numpy as jnp
from jax.experimental import pallas as pl
from jax.experimental.pallas import tpu as pltpu

LANES = 128      # lane width (last dim of every vreg)
SUBLANES = 8     # sublane count
MAX_TM = 512     # row-tile size: 512*128*4B = 256 KiB per input per buffer


def _dice_sums_kernel(pr_ref, gt_ref, out_ref, acc_tp, acc_sp, acc_sg, *,
                      tm, valid_rows):
    """Accumulates tp = sum(gt*sigmoid(pr)), sum(sigmoid(pr)), sum(gt)."""
    i = pl.program_id(0)
    n_tiles = pl.num_programs(0)

    @pl.when(i == 0)
    def _init():
        acc_tp[...] = jnp.zeros_like(acc_tp)
        acc_sp[...] = jnp.zeros_like(acc_sp)
        acc_sg[...] = jnp.zeros_like(acc_sg)

    def _part(v):
        # (tm, 128) -> (8, 128) partial sum: splitting the leading dim into
        # vreg-sized (8, 128) tiles is layout-free; the axis-0 sum is pure
        # per-vreg VPU adds (no XLU / scalar traffic per tile).
        return jnp.sum(v.reshape(tm // SUBLANES, SUBLANES, LANES), axis=0)

    @pl.when(i < n_tiles - 1)
    def _fast():  # fully-valid tiles: no mask work at all
        x = pr_ref[...].astype(jnp.float32)
        z = gt_ref[...].astype(jnp.float32)
        s = jax.nn.sigmoid(x)
        acc_tp[...] += _part(z * s)
        acc_sp[...] += _part(s)
        acc_sg[...] += _part(z)

    @pl.when(i == n_tiles - 1)
    def _last():  # ragged tile: mask rows past the real data, then finalize
        x = pr_ref[...].astype(jnp.float32)
        z = gt_ref[...].astype(jnp.float32)
        s = jax.nn.sigmoid(x)
        row = jax.lax.broadcasted_iota(jnp.int32, (tm, LANES), 0)
        mask = (i * tm + row) < valid_rows
        zero = jnp.zeros_like(s)
        acc_tp[...] += _part(jnp.where(mask, z * s, zero))
        acc_sp[...] += _part(jnp.where(mask, s, zero))
        acc_sg[...] += _part(jnp.where(mask, z, zero))
        # Single cross-lane reduction + SMEM store, once per kernel call.
        out_ref[0] = jnp.sum(acc_tp[...])
        out_ref[1] = jnp.sum(acc_sp[...])
        out_ref[2] = jnp.sum(acc_sg[...])


def dice_loss(y_pr, y_gt, eps=1e-7):
    """DiceLoss forward: 1 - f_score(y_pr, y_gt, beta=1, activation='sigmoid')."""
    # TODO(synk): the 'softmax2d' activation and `threshold` binarization
    # branches of f_score (unused by DiceLoss defaults) are not implemented.
    assert y_pr.shape == y_gt.shape
    n_total = y_pr.size

    flat_pr = y_pr.reshape(-1)          # keep native dtype; cast in-kernel
    flat_gt = y_gt.reshape(-1)

    rows_data = pl.cdiv(n_total, LANES)                 # rows holding real data
    rows = pl.cdiv(rows_data, SUBLANES) * SUBLANES      # sublane-aligned rows
    pad = rows * LANES - n_total
    lane_pad = rows_data * LANES - n_total              # zero logits in last data row
    if pad:  # only copies when n_total is not already a multiple of 8*128
        flat_pr = jnp.pad(flat_pr, (0, pad))
        flat_gt = jnp.pad(flat_gt, (0, pad))

    pr2 = flat_pr.reshape(rows, LANES)
    gt2 = flat_gt.reshape(rows, LANES)

    tm = min(MAX_TM, rows)              # rows is a multiple of 8, so tm is too
    n_tiles = pl.cdiv(rows, tm)

    bytes_accessed = (pr2.size * pr2.dtype.itemsize
                      + gt2.size * gt2.dtype.itemsize + 3 * 4)

    sums = pl.pallas_call(
        functools.partial(_dice_sums_kernel, tm=tm, valid_rows=rows_data),
        out_shape=jax.ShapeDtypeStruct((3,), jnp.float32),
        grid_spec=pltpu.PrefetchScalarGridSpec(
            num_scalar_prefetch=0,
            grid=(n_tiles,),
            in_specs=[
                pl.BlockSpec((tm, LANES), lambda i: (i, 0)),
                pl.BlockSpec((tm, LANES), lambda i: (i, 0)),
            ],
            out_specs=pl.BlockSpec(memory_space=pltpu.MemorySpace.SMEM),
            scratch_shapes=[
                pltpu.VMEM((SUBLANES, LANES), jnp.float32),  # acc_tp
                pltpu.VMEM((SUBLANES, LANES), jnp.float32),  # acc_sp
                pltpu.VMEM((SUBLANES, LANES), jnp.float32),  # acc_sg
            ],
        ),
        compiler_params=pltpu.CompilerParams(
            dimension_semantics=("arbitrary",)),
        cost_estimate=pl.CostEstimate(
            flops=6 * n_total,
            transcendentals=n_total,
            bytes_accessed=bytes_accessed),
    )(pr2, gt2)

    tp = sums[0]
    sp = sums[1] - 0.5 * lane_pad       # padded logits are 0 -> sigmoid = 0.5
    sg = sums[2]
    fp = sp - tp
    fn = sg - tp
    beta2 = 1.0                         # beta = 1
    score = ((1.0 + beta2) * tp + eps) / ((1.0 + beta2) * tp + beta2 * fn + fp + eps)
    return 1.0 - score


def _reference(y_pr, y_gt, eps=1e-7):
    pr = jax.nn.sigmoid(y_pr.astype(jnp.float32))
    gt = y_gt.astype(jnp.float32)
    tp = jnp.sum(gt * pr)
    fp = jnp.sum(pr) - tp
    fn = jnp.sum(gt) - tp
    score = (2.0 * tp + eps) / (2.0 * tp + fn + fp + eps)
    return 1.0 - score


if __name__ == "__main__":
    key = jax.random.PRNGKey(0)
    k1, k2 = jax.random.split(key)
    # NCHW logits and binary ground-truth masks
    y_pr = jax.random.normal(k1, (2, 4, 16, 16), dtype=jnp.float32)
    y_gt = jax.random.bernoulli(k2, 0.5, (2, 4, 16, 16)).astype(jnp.float32)

    loss = jax.block_until_ready(dice_loss(y_pr, y_gt))
    ref = jax.block_until_ready(_reference(y_pr, y_gt))

    assert jnp.allclose(loss, ref, atol=1e-5, rtol=1e-5), (loss, ref)
    print("KERNEL_OK")
</pallas_src>

<mosaic_0001>
module attributes {stable_mosaic.version = 11 : i64} {
  func.func @_dice_sums_kernel(%arg0: i32, %arg1: memref<16x128xf32, #tpu.memory_space<vmem>>, %arg2: memref<16x128xf32, #tpu.memory_space<vmem>>, %arg3: memref<3xf32, #tpu.memory_space<smem>>, %arg4: memref<8x128xf32, #tpu.memory_space<vmem>>, %arg5: memref<8x128xf32, #tpu.memory_space<vmem>>, %arg6: memref<8x128xf32, #tpu.memory_space<vmem>>) attributes {dimension_semantics = [#tpu.dimension_semantics<arbitrary>], iteration_bounds = array<i64: 1>, scalar_prefetch = 0 : i64, scratch_operands = 3 : i64, tpu.core_type = #tpu.core_type<tc>, window_params = [{transform_indices = @transform_0, window_bounds = array<i64: 16, 128>}, {transform_indices = @transform_1, window_bounds = array<i64: 16, 128>}, {transform_indices = @transform_2, window_bounds = array<i64: 3>}]} {
    %c0_i32 = arith.constant 0 : i32
    %0 = arith.cmpi eq, %arg0, %c0_i32 : i32
    %1 = arith.extui %0 : i1 to i32
    %c0_i32_0 = arith.constant 0 : i32
    %2 = arith.cmpi ne, %1, %c0_i32_0 : i32
    scf.if %2 {
      %cst = arith.constant 0.000000e+00 : f32
      %9 = vector.broadcast %cst : f32 to vector<8x128xf32>
      %c0 = arith.constant 0 : index
      %c0_5 = arith.constant 0 : index
      %10 = vector.load %arg4[%c0, %c0_5] : memref<8x128xf32, #tpu.memory_space<vmem>>, vector<8x128xf32>
      tpu.vector_store %arg4[%c0, %c0_5], %9 {strides = array<i32>} : memref<8x128xf32, #tpu.memory_space<vmem>>, vector<8x128xf32>,
      %cst_6 = arith.constant 0.000000e+00 : f32
      %11 = vector.broadcast %cst_6 : f32 to vector<8x128xf32>
      %c0_7 = arith.constant 0 : index
      %c0_8 = arith.constant 0 : index
      %12 = vector.load %arg5[%c0_7, %c0_8] : memref<8x128xf32, #tpu.memory_space<vmem>>, vector<8x128xf32>
      tpu.vector_store %arg5[%c0_7, %c0_8], %11 {strides = array<i32>} : memref<8x128xf32, #tpu.memory_space<vmem>>, vector<8x128xf32>,
      %cst_9 = arith.constant 0.000000e+00 : f32
      %13 = vector.broadcast %cst_9 : f32 to vector<8x128xf32>
      %c0_10 = arith.constant 0 : index
      %c0_11 = arith.constant 0 : index
      %14 = vector.load %arg6[%c0_10, %c0_11] : memref<8x128xf32, #tpu.memory_space<vmem>>, vector<8x128xf32>
      tpu.vector_store %arg6[%c0_10, %c0_11], %13 {strides = array<i32>} : memref<8x128xf32, #tpu.memory_space<vmem>>, vector<8x128xf32>,
    } else {
    }
    %c0_i32_1 = arith.constant 0 : i32
    %3 = arith.cmpi slt, %arg0, %c0_i32_1 : i32
    %4 = arith.extui %3 : i1 to i32
    %c0_i32_2 = arith.constant 0 : i32
    %5 = arith.cmpi ne, %4, %c0_i32_2 : i32
    scf.if %5 {
      %c0 = arith.constant 0 : index
      %c0_5 = arith.constant 0 : index
      %9 = vector.load %arg1[%c0, %c0_5] : memref<16x128xf32, #tpu.memory_space<vmem>>, vector<16x128xf32>
      %c0_6 = arith.constant 0 : index
      %c0_7 = arith.constant 0 : index
      %10 = vector.load %arg2[%c0_6, %c0_7] : memref<16x128xf32, #tpu.memory_space<vmem>>, vector<16x128xf32>
      %11 = arith.negf %9 : vector<16x128xf32>
      %12 = math.exp %11 : vector<16x128xf32>
      %cst = arith.constant 1.000000e+00 : f32
      %13 = vector.broadcast %cst : f32 to vector<16x128xf32>
      %14 = arith.addf %13, %12 : vector<16x128xf32>
      %15 = arith.divf %13, %14 : vector<16x128xf32>
      %c0_8 = arith.constant 0 : index
      %c0_9 = arith.constant 0 : index
      %16 = vector.load %arg4[%c0_8, %c0_9] : memref<8x128xf32, #tpu.memory_space<vmem>>, vector<8x128xf32>
      %17 = arith.mulf %10, %15 : vector<16x128xf32>
      %18 = vector.shape_cast %17 : vector<16x128xf32> to vector<2x8x128xf32>
      %cst_10 = arith.constant dense<0.000000e+00> : vector<8x128xf32>
      %19 = vector.multi_reduction <add>, %18, %cst_10 [0] : vector<2x8x128xf32> to vector<8x128xf32>
      %20 = arith.addf %16, %19 : vector<8x128xf32>
      %c0_11 = arith.constant 0 : index
      %c0_12 = arith.constant 0 : index
      %21 = vector.load %arg4[%c0_11, %c0_12] : memref<8x128xf32, #tpu.memory_space<vmem>>, vector<8x128xf32>
      tpu.vector_store %arg4[%c0_11, %c0_12], %20 {strides = array<i32>} : memref<8x128xf32, #tpu.memory_space<vmem>>, vector<8x128xf32>,
      %c0_13 = arith.constant 0 : index
      %c0_14 = arith.constant 0 : index
      %22 = vector.load %arg5[%c0_13, %c0_14] : memref<8x128xf32, #tpu.memory_space<vmem>>, vector<8x128xf32>
      %23 = vector.shape_cast %15 : vector<16x128xf32> to vector<2x8x128xf32>
      %cst_15 = arith.constant dense<0.000000e+00> : vector<8x128xf32>
      %24 = vector.multi_reduction <add>, %23, %cst_15 [0] : vector<2x8x128xf32> to vector<8x128xf32>
      %25 = arith.addf %22, %24 : vector<8x128xf32>
      %c0_16 = arith.constant 0 : index
      %c0_17 = arith.constant 0 : index
      %26 = vector.load %arg5[%c0_16, %c0_17] : memref<8x128xf32, #tpu.memory_space<vmem>>, vector<8x128xf32>
      tpu.vector_store %arg5[%c0_16, %c0_17], %25 {strides = array<i32>} : memref<8x128xf32, #tpu.memory_space<vmem>>, vector<8x128xf32>,
      %c0_18 = arith.constant 0 : index
      %c0_19 = arith.constant 0 : index
      %27 = vector.load %arg6[%c0_18, %c0_19] : memref<8x128xf32, #tpu.memory_space<vmem>>, vector<8x128xf32>
      %28 = vector.shape_cast %10 : vector<16x128xf32> to vector<2x8x128xf32>
      %cst_20 = arith.constant dense<0.000000e+00> : vector<8x128xf32>
      %29 = vector.multi_reduction <add>, %28, %cst_20 [0] : vector<2x8x128xf32> to vector<8x128xf32>
      %30 = arith.addf %27, %29 : vector<8x128xf32>
      %c0_21 = arith.constant 0 : index
      %c0_22 = arith.constant 0 : index
      %31 = vector.load %arg6[%c0_21, %c0_22] : memref<8x128xf32, #tpu.memory_space<vmem>>, vector<8x128xf32>
      tpu.vector_store %arg6[%c0_21, %c0_22], %30 {strides = array<i32>} : memref<8x128xf32, #tpu.memory_space<vmem>>, vector<8x128xf32>,
    } else {
    }
    %c0_i32_3 = arith.constant 0 : i32
    %6 = arith.cmpi eq, %arg0, %c0_i32_3 : i32
    %7 = arith.extui %6 : i1 to i32
    %c0_i32_4 = arith.constant 0 : i32
    %8 = arith.cmpi ne, %7, %c0_i32_4 : i32
    scf.if %8 {
      %c0 = arith.constant 0 : index
      %c0_5 = arith.constant 0 : index
      %9 = vector.load %arg1[%c0, %c0_5] : memref<16x128xf32, #tpu.memory_space<vmem>>, vector<16x128xf32>
      %c0_6 = arith.constant 0 : index
      %c0_7 = arith.constant 0 : index
      %10 = vector.load %arg2[%c0_6, %c0_7] : memref<16x128xf32, #tpu.memory_space<vmem>>, vector<16x128xf32>
      %11 = arith.negf %9 : vector<16x128xf32>
      %12 = math.exp %11 : vector<16x128xf32>
      %cst = arith.constant 1.000000e+00 : f32
      %13 = vector.broadcast %cst : f32 to vector<16x128xf32>
      %14 = arith.addf %13, %12 : vector<16x128xf32>
      %15 = arith.divf %13, %14 : vector<16x128xf32>
      %16 = tpu.iota {dimensions = array<i32: 0>} : vector<16x128xi32>
      %c16_i32 = arith.constant 16 : i32
      %17 = arith.muli %arg0, %c16_i32 : i32
      %18 = vector.broadcast %17 : i32 to vector<16x128xi32>
      %19 = arith.addi %18, %16 : vector<16x128xi32>
      %c16_i32_8 = arith.constant 16 : i32
      %20 = vector.broadcast %c16_i32_8 : i32 to vector<16x128xi32>
      %21 = arith.cmpi slt, %19, %20 : vector<16x128xi32>
      %cst_9 = arith.constant 0.000000e+00 : f32
      %22 = vector.broadcast %cst_9 : f32 to vector<16x128xf32>
      %c0_10 = arith.constant 0 : index
      %c0_11 = arith.constant 0 : index
      %23 = vector.load %arg4[%c0_10, %c0_11] : memref<8x128xf32, #tpu.memory_space<vmem>>, vector<8x128xf32>
      %24 = arith.mulf %10, %15 : vector<16x128xf32>
      %25 = arith.select %21, %24, %22 : vector<16x128xi1>, vector<16x128xf32>
      %26 = vector.shape_cast %25 : vector<16x128xf32> to vector<2x8x128xf32>
      %cst_12 = arith.constant dense<0.000000e+00> : vector<8x128xf32>
      %27 = vector.multi_reduction <add>, %26, %cst_12 [0] : vector<2x8x128xf32> to vector<8x128xf32>
      %28 = arith.addf %23, %27 : vector<8x128xf32>
      %c0_13 = arith.constant 0 : index
      %c0_14 = arith.constant 0 : index
      %29 = vector.load %arg4[%c0_13, %c0_14] : memref<8x128xf32, #tpu.memory_space<vmem>>, vector<8x128xf32>
      tpu.vector_store %arg4[%c0_13, %c0_14], %28 {strides = array<i32>} : memref<8x128xf32, #tpu.memory_space<vmem>>, vector<8x128xf32>,
      %c0_15 = arith.constant 0 : index
      %c0_16 = arith.constant 0 : index
      %30 = vector.load %arg5[%c0_15, %c0_16] : memref<8x128xf32, #tpu.memory_space<vmem>>, vector<8x128xf32>
      %31 = arith.select %21, %15, %22 : vector<16x128xi1>, vector<16x128xf32>
      %32 = vector.shape_cast %31 : vector<16x128xf32> to vector<2x8x128xf32>
      %cst_17 = arith.constant dense<0.000000e+00> : vector<8x128xf32>
      %33 = vector.multi_reduction <add>, %32, %cst_17 [0] : vector<2x8x128xf32> to vector<8x128xf32>
      %34 = arith.addf %30, %33 : vector<8x128xf32>
      %c0_18 = arith.constant 0 : index
      %c0_19 = arith.constant 0 : index
      %35 = vector.load %arg5[%c0_18, %c0_19] : memref<8x128xf32, #tpu.memory_space<vmem>>, vector<8x128xf32>
      tpu.vector_store %arg5[%c0_18, %c0_19], %34 {strides = array<i32>} : memref<8x128xf32, #tpu.memory_space<vmem>>, vector<8x128xf32>,
      %c0_20 = arith.constant 0 : index
      %c0_21 = arith.constant 0 : index
      %36 = vector.load %arg6[%c0_20, %c0_21] : memref<8x128xf32, #tpu.memory_space<vmem>>, vector<8x128xf32>
      %37 = arith.select %21, %10, %22 : vector<16x128xi1>, vector<16x128xf32>
      %38 = vector.shape_cast %37 : vector<16x128xf32> to vector<2x8x128xf32>
      %cst_22 = arith.constant dense<0.000000e+00> : vector<8x128xf32>
      %39 = vector.multi_reduction <add>, %38, %cst_22 [0] : vector<2x8x128xf32> to vector<8x128xf32>
      %40 = arith.addf %36, %39 : vector<8x128xf32>
      %c0_23 = arith.constant 0 : index
      %c0_24 = arith.constant 0 : index
      %41 = vector.load %arg6[%c0_23, %c0_24] : memref<8x128xf32, #tpu.memory_space<vmem>>, vector<8x128xf32>
      tpu.vector_store %arg6[%c0_23, %c0_24], %40 {strides = array<i32>} : memref<8x128xf32, #tpu.memory_space<vmem>>, vector<8x128xf32>,
      %c0_25 = arith.constant 0 : index
      %c0_26 = arith.constant 0 : index
      %42 = vector.load %arg4[%c0_25, %c0_26] : memref<8x128xf32, #tpu.memory_space<vmem>>, vector<8x128xf32>
      %43 = vector.shape_cast %42 : vector<8x128xf32> to vector<1x8x128xf32>
      %cst_27 = arith.constant dense<0.000000e+00> : vector<1xf32>
      %44 = vector.multi_reduction <add>, %43, %cst_27 [1, 2] : vector<1x8x128xf32> to vector<1xf32>
      %45 = vector.shape_cast %44 : vector<1xf32> to vector<1x1x1xf32>
      %46 = vector.extract %45[0, 0, 0] : f32 from vector<1x1x1xf32>
      %c0_28 = arith.constant 0 : index
      %47 = memref.load %arg3[%c0_28] : memref<3xf32, #tpu.memory_space<smem>>
      memref.store %46, %arg3[%c0_28] : memref<3xf32, #tpu.memory_space<smem>>
      %c0_29 = arith.constant 0 : index
      %c0_30 = arith.constant 0 : index
      %48 = vector.load %arg5[%c0_29, %c0_30] : memref<8x128xf32, #tpu.memory_space<vmem>>, vector<8x128xf32>
      %49 = vector.shape_cast %48 : vector<8x128xf32> to vector<1x8x128xf32>
      %cst_31 = arith.constant dense<0.000000e+00> : vector<1xf32>
      %50 = vector.multi_reduction <add>, %49, %cst_31 [1, 2] : vector<1x8x128xf32> to vector<1xf32>
      %51 = vector.shape_cast %50 : vector<1xf32> to vector<1x1x1xf32>
      %52 = vector.extract %51[0, 0, 0] : f32 from vector<1x1x1xf32>
      %c1 = arith.constant 1 : index
      %53 = memref.load %arg3[%c1] : memref<3xf32, #tpu.memory_space<smem>>
      memref.store %52, %arg3[%c1] : memref<3xf32, #tpu.memory_space<smem>>
      %c0_32 = arith.constant 0 : index
      %c0_33 = arith.constant 0 : index
      %54 = vector.load %arg6[%c0_32, %c0_33] : memref<8x128xf32, #tpu.memory_space<vmem>>, vector<8x128xf32>
      %55 = vector.shape_cast %54 : vector<8x128xf32> to vector<1x8x128xf32>
      %cst_34 = arith.constant dense<0.000000e+00> : vector<1xf32>
      %56 = vector.multi_reduction <add>, %55, %cst_34 [1, 2] : vector<1x8x128xf32> to vector<1xf32>
      %57 = vector.shape_cast %56 : vector<1xf32> to vector<1x1x1xf32>
      %58 = vector.extract %57[0, 0, 0] : f32 from vector<1x1x1xf32>
      %c2 = arith.constant 2 : index
      %59 = memref.load %arg3[%c2] : memref<3xf32, #tpu.memory_space<smem>>
      memref.store %58, %arg3[%c2] : memref<3xf32, #tpu.memory_space<smem>>
    } else {
    }
    return
  }
  func.func @transform_0(%arg0: i32) -> (i32, i32) {
    %c0_i32 = arith.constant 0 : i32
    %c0_i32_0 = arith.constant 0 : i32
    return %arg0, %c0_i32 : i32, i32
  }
  func.func @transform_1(%arg0: i32) -> (i32, i32) {
    %c0_i32 = arith.constant 0 : i32
    %c0_i32_0 = arith.constant 0 : i32
    return %arg0, %c0_i32 : i32, i32
  }
  func.func @transform_2(%arg0: i32) -> i32 {
    %c0_i32 = arith.constant 0 : i32
    %c0_i32_0 = arith.constant 0 : i32
    return %c0_i32 : i32
  }
}

</mosaic_0001>

<llo_original>
// kernel: tpu_custom_call.1
$region0: #{tpu_custom_call.1}
  #allocation0 [shape = 'u32[]', space=smem, size = 0x4, offset = 0x4, fixed_abs, tag = 'smem constant byte address 0x4 - core index']
  #allocation1 [shape = 'u32[144,128]{1,0:T(1,128)}', space=vmem, size = 0x12000, scoped, tag = 'internal scratch']
  #allocation2 [shape = 'f32[8,128]{1,0:T(8,128)}', space=vmem, size = 0x1000, scoped, tag = 'scratch operand']
  #allocation3 [shape = 'f32[8,128]{1,0:T(8,128)}', space=vmem, size = 0x1000, scoped, tag = 'scratch operand']
  #allocation4 [shape = 'f32[8,128]{1,0:T(8,128)}', space=vmem, size = 0x1000, scoped, tag = 'scratch operand']
  %s0 = inlined_call_operand.hbm [shape: f32[16,128], index: 0, kind: input, shape index: {}]
  %s1 = inlined_call_operand.hbm [shape: f32[16,128], index: 1, kind: input, shape index: {}]
  %s2 = inlined_call_operand.hbm [shape: f32[3], index: 2, kind: output, shape index: {}]
  %s3 = sld [smem:[#allocation0]]
  $region38: #{tpu_custom_call.1} parent=0
    _
  %s5 = ssub.s32 1, %s3
  %s6 = scalar_select 0, %s5, %s3
  $region1: #{tpu_custom_call.1} parent=0
    #allocation5 [shape = 'u8[8192]{0}', space=vmem, size = 0x2000, scoped, tag = 'input window, operand 0, single buffered']
    #allocation6 [shape = 's32[1]{0}', space=sflag, size = 0x4, scoped, tag = 'scoped memory for tpu_custom_call.1']
    #allocation7 [shape = 's32[1]{0}', space=sflag, size = 0x4, scoped, tag = 'scoped memory for tpu_custom_call.1']
    #allocation8 [shape = 'u8[8192]{0}', space=vmem, size = 0x2000, scoped, tag = 'input window, operand 1, single buffered']
    #allocation9 [shape = 's32[1]{0}', space=sflag, size = 0x4, scoped, tag = 'scoped memory for tpu_custom_call.1']
    #allocation10 [shape = 'u8[512]{0}', space=smem, size = 0x200, scoped, tag = 'output window, operand 0, single buffered']
    %7 = vsyncpa [#allocation6], 0
    %8 = vsyncpa [#allocation9], 0
    %9 = vsyncpa [#allocation7], 0
    // Predicated region
    $region2: #{tpu_custom_call.1} parent=1 // pred_check
      _
    $region3: #{tpu_custom_call.1} parent=1 // pred_check_branch
      %11 = sbr.rel (0) target = $region5
    $region4: #{tpu_custom_call.1} parent=1 // pred_region
      %s13 = ssub.s32 256, 256
      %14 = vsyncadd [#allocation6], %s13
      %s15 = sshll.u32 [#allocation5], 4
      %s16 = int_to_ptr.vmem [resolvable:$true] %s15
      %21 = dma.hbm_to_vmem [thread:$0]  %s0, 256, %s16, [#allocation6], 128, 128, 8
    $region5: #{tpu_custom_call.1} parent=1 // pred_fallthru
      _
    // Predicated region
    $region6: #{tpu_custom_call.1} parent=1 // pred_check
      _
    $region7: #{tpu_custom_call.1} parent=1 // pred_check_branch
      %23 = sbr.rel (0) target = $region9
    $region8: #{tpu_custom_call.1} parent=1 // pred_region
      %s25 = ssub.s32 256, 256
      %26 = vsyncadd [#allocation9], %s25
      %s27 = sshll.u32 [#allocation8], 4
      %s28 = int_to_ptr.vmem [resolvable:$true] %s27
      %33 = dma.hbm_to_vmem [thread:$0]  %s1, 256, %s28, [#allocation9], 128, 128, 8
    $region9: #{tpu_custom_call.1} parent=1 // pred_fallthru
      _
    // Predicated region
    $region10: #{tpu_custom_call.1} parent=1 // pred_check
      _
    $region11: #{tpu_custom_call.1} parent=1 // pred_check_branch
      %35 = sbr.rel (0) target = $region13
    $region12: #{tpu_custom_call.1} parent=1 // pred_region
      %36 = dma.done [#allocation6], 256
    $region13: #{tpu_custom_call.1} parent=1 // pred_fallthru
      _
    // Predicated region
    $region14: #{tpu_custom_call.1} parent=1 // pred_check
      _
    $region15: #{tpu_custom_call.1} parent=1 // pred_check_branch
      %38 = sbr.rel (0) target = $region17
    $region16: #{tpu_custom_call.1} parent=1 // pred_region
      %39 = dma.done [#allocation9], 256
    $region17: #{tpu_custom_call.1} parent=1 // pred_fallthru
      _
    %p40 = scmp.eq.s32.totalorder 0, 0
    // Predicated region
    $region18: #{tpu_custom_call.1} parent=1 // pred_check
      %p41 = pneg %p40
    $region19: #{tpu_custom_call.1} parent=1 // pred_check_branch
      %43 = sbr.rel (%p41) target = $region21
    $region20: #{tpu_custom_call.1} parent=1 // pred_region
      %44 = vst [vmem:[#allocation2] sm:$0xff] 0.0
      %45 = vst [vmem:[#allocation3] sm:$0xff] 0.0
      %46 = vst [vmem:[#allocation4] sm:$0xff] 0.0
    $region21: #{tpu_custom_call.1} parent=1 // pred_fallthru
      _
    %p47 = scmp.lt.s32.totalorder 0, 0
    // Predicated region
    $region22: #{tpu_custom_call.1} parent=1 // pred_check
      %p48 = pneg %p47
    $region23: #{tpu_custom_call.1} parent=1 // pred_check_branch
      %50 = sbr.rel (%p48) target = $region25
    $region24: #{tpu_custom_call.1} parent=1 // pred_region
      %v51 = vld [vmem:[#allocation5] sm:$0xff]
      %v52 = vld [vmem:[#allocation5 + $0x8] sm:$0xff]
      %v53 = vld [vmem:[#allocation8] sm:$0xff]
      %v54 = vld [vmem:[#allocation8 + $0x8] sm:$0xff]
      %v55 = vxor.u32 %v51, 2147483648
      %v56 = vxor.u32 %v52, 2147483648
      %v57 = vmul.f32 %v55, 1.442695
      %v58 = vpow.pop %v57
      %v59 = vmul.f32 %v56, 1.442695
      %v60 = vpow.pop %v59
      %v61 = vadd.f32 %v58, 1.0
      %v62 = vadd.f32 %v60, 1.0
      %v63 = vrcp.pop %v61
      %v64 = vmul.f32 1.0, %v63
      %v65 = vrcp.pop %v62
      %v66 = vmul.f32 1.0, %v65
      %v67 = vld [vmem:[#allocation2] sm:$0xff]
      %v68 = vmul.f32 %v53, %v64
      %v69 = vmul.f32 %v54, %v66
      %v70 = vadd.f32 %v68, %v69
      %v71 = vadd.f32 %v67, %v70
      %72 = vst [vmem:[#allocation2] sm:$0xff] %v71
      %v73 = vld [vmem:[#allocation3] sm:$0xff]
      %v74 = vadd.f32 %v64, %v66
      %v75 = vadd.f32 %v73, %v74
      %76 = vst [vmem:[#allocation3] sm:$0xff] %v75
      %v77 = vld [vmem:[#allocation4] sm:$0xff]
      %v78 = vadd.f32 %v53, %v54
      %v79 = vadd.f32 %v77, %v78
      %80 = vst [vmem:[#allocation4] sm:$0xff] %v79
    $region25: #{tpu_custom_call.1} parent=1 // pred_fallthru
      _
    // Predicated region
    $region26: #{tpu_custom_call.1} parent=1 // pred_check
      %p81 = pneg %p40
    $region27: #{tpu_custom_call.1} parent=1 // pred_check_branch
      %83 = sbr.rel (%p81) target = $region29
    $region28: #{tpu_custom_call.1} parent=1 // pred_region
      %v84 = vld [vmem:[#allocation5] sm:$0xff]
      %v85 = vld [vmem:[#allocation5 + $0x8] sm:$0xff]
      %v86 = vld [vmem:[#allocation8] sm:$0xff]
      %v87 = vld [vmem:[#allocation8 + $0x8] sm:$0xff]
      %v88 = vxor.u32 %v84, 2147483648
      %v89 = vxor.u32 %v85, 2147483648
      %v90 = vmul.f32 %v88, 1.442695
      %v91 = vpow.pop %v90
      %v92 = vmul.f32 %v89, 1.442695
      %v93 = vpow.pop %v92
      %v94 = vadd.f32 %v91, 1.0
      %v95 = vadd.f32 %v93, 1.0
      %v96 = vrcp.pop %v94
      %v97 = vmul.f32 1.0, %v96
      %v98 = vrcp.pop %v95
      %v99 = vmul.f32 1.0, %v98
      %v100 = vlaneseq
      %v101 = vshrl.u32 %v100, 7
      %v102 = vadd.s32 %v101, 8
      %s103 = smul.u32 0, 16
      %v104 = vstv %s103
      %v105 = vadd.s32 %v104, %v101
      %v106 = vadd.s32 %v104, %v102
      %vm107 = vcmp.lt.s32.totalorder %v105, 16
      %vm108 = vcmp.lt.s32.totalorder %v106, 16
      %v109 = vld [vmem:[#allocation2] sm:$0xff]
      %v110 = vmul.f32 %v86, %v97
      %v111 = vmul.f32 %v87, %v99
      %v112 = vsel %vm107, %v110, 0.0
      %v113 = vsel %vm108, %v111, 0.0
      %v114 = vadd.f32 %v112, %v113
      %v115 = vadd.f32 %v109, %v114
      %116 = vst [vmem:[#allocation2] sm:$0xff] %v115
      %v117 = vld [vmem:[#allocation3] sm:$0xff]
      %v118 = vsel %vm107, %v97, 0.0
      %v119 = vsel %vm108, %v99, 0.0
      %v120 = vadd.f32 %v118, %v119
      %v121 = vadd.f32 %v117, %v120
      %122 = vst [vmem:[#allocation3] sm:$0xff] %v121
      %v123 = vld [vmem:[#allocation4] sm:$0xff]
      %v124 = vsel %vm107, %v86, 0.0
      %v125 = vsel %vm108, %v87, 0.0
      %v126 = vadd.f32 %v124, %v125
      %v127 = vadd.f32 %v123, %v126
      %128 = vst [vmem:[#allocation4] sm:$0xff] %v127
      %v129 = vld [vmem:[#allocation2] sm:$0xff]
      %130 = vadd.xlane.f32.xlu0 %v129
      %v131 = vpop.xlane.xlu0 %130
      %v132 = vrot.slane %v131, 4
      %v133 = vadd.f32 %v131, %v132
      %v134 = vrot.slane %v133, 2
      %v135 = vadd.f32 %v133, %v134
      %v136 = vrot.slane %v135, 1
      %v137 = vadd.f32 %v135, %v136
      %s138 = vtos %v137
      %s139 = scalar_lea.smem [#allocation10], 0
      %140 = sst [smem:[%s139]] %s138
      %v141 = vld [vmem:[#allocation3] sm:$0xff]
      %142 = vadd.xlane.f32.xlu0 %v141
      %v143 = vpop.xlane.xlu0 %142
      %v144 = vrot.slane %v143, 4
      %v145 = vadd.f32 %v143, %v144
      %v146 = vrot.slane %v145, 2
      %v147 = vadd.f32 %v145, %v146
      %v148 = vrot.slane %v147, 1
      %v149 = vadd.f32 %v147, %v148
      %s150 = vtos %v149
      %s151 = scalar_lea.smem [#allocation10], 1
      %152 = sst [smem:[%s151]] %s150
      %v153 = vld [vmem:[#allocation4] sm:$0xff]
      %154 = vadd.xlane.f32.xlu0 %v153
      %v155 = vpop.xlane.xlu0 %154
      %v156 = vrot.slane %v155, 4
      %v157 = vadd.f32 %v155, %v156
      %v158 = vrot.slane %v157, 2
      %v159 = vadd.f32 %v157, %v158
      %v160 = vrot.slane %v159, 1
      %v161 = vadd.f32 %v159, %v160
      %s162 = vtos %v161
      %s163 = scalar_lea.smem [#allocation10], 2
      %164 = sst [smem:[%s163]] %s162
    $region29: #{tpu_custom_call.1} parent=1 // pred_fallthru
      _
    // Predicated region
    $region30: #{tpu_custom_call.1} parent=1 // pred_check
      _
    $region31: #{tpu_custom_call.1} parent=1 // pred_check_branch
      %166 = sbr.rel (0) target = $region33
    $region32: #{tpu_custom_call.1} parent=1 // pred_region
      %s168 = ssub.s32 16, 16
      %169 = vsyncadd [#allocation7], %s168
      %172 = dma.smem_to_hbm [#allocation10], 16, %s2, [#allocation7]
    $region33: #{tpu_custom_call.1} parent=1 // pred_fallthru
      _
    // Predicated region
    $region34: #{tpu_custom_call.1} parent=1 // pred_check
      _
    $region35: #{tpu_custom_call.1} parent=1 // pred_check_branch
      %174 = sbr.rel (0) target = $region37
    $region36: #{tpu_custom_call.1} parent=1 // pred_region
      %175 = dma.done [#allocation7], 16
    $region37: #{tpu_custom_call.1} parent=1 // pred_fallthru
      _
    %176 = sfence
    %177 = vsyncpa [#allocation6], 1
    %178 = vsyncpa [#allocation9], 1
    %179 = vsyncpa [#allocation7], 1

</llo_original>
